<compile_context>
chip_gen: v7x
topology: tpu7x:2x2x1
jax: 0.10.0
libtpu: 0.0.40
codegen_flags: <defaults>
</compile_context>

<pallas_src>
import functools

import jax
import jax.numpy as jnp
from jax.experimental import pallas as pl
from jax.experimental.pallas import tpu as pltpu


_LANES = 128
_MAX_TILE_ROWS = 2048  # 2048 * 128 * 4 B = 1 MiB per operand block


def _codes_padded(c: int) -> int:
    """Smallest divisor of 128 that is >= c (so the cw pattern tiles a lane row)."""
    for d in (1, 2, 4, 8, 16, 32, 64, 128):
        if d >= c:
            return d
    # TODO(synk): support #codes > 128 (would need a multi-row code-weight slab).
    raise NotImplementedError("WeightedSmoothL1Loss Pallas kernel supports #codes <= 128")


def _wsl1_kernel(cw_ref, x_ref, t_ref, w_ref, o_ref, *,
                 beta: float, half_over_beta: float, half_beta: float, use_l1: bool):
    """Elementwise hot path on a lane-dense (TR, 128) tile."""
    x = x_ref[...].astype(jnp.float32)      # (TR, 128)
    t = t_ref[...].astype(jnp.float32)      # (TR, 128)
    cw = cw_ref[...]                        # (1, 128)  f32, broadcast over rows
    w = w_ref[...]                          # (TR, 128) f32, lane-dense anchor weights

    # target = where(isnan(target), input, target)
    t = jnp.where(jnp.isnan(t), x, t)
    n = jnp.abs((x - t) * cw)

    if use_l1:
        loss = n
    else:
        loss = jnp.where(n < beta, half_over_beta * (n * n), n - half_beta)

    o_ref[...] = (loss * w).astype(o_ref.dtype)


def weighted_smooth_l1_loss(inp, target, code_weights=None, weights=None,
                            beta: float = 1.0 / 9.0):
    """Returns (B, A, C) weighted smooth-L1 loss, no reduction (matches the PyTorch module)."""
    B, A, C = inp.shape
    out_dtype = inp.dtype

    c_pad = _codes_padded(C)
    apr = _LANES // c_pad                    # anchors per 128-lane row

    # --- code weights: single constant lane row --------------------------------
    cw = (jnp.asarray(code_weights, jnp.float32).reshape(C)
          if code_weights is not None else jnp.ones((C,), jnp.float32))
    if c_pad != C:
        cw = jnp.pad(cw, (0, c_pad - C))
    cw_row = jnp.tile(cw, apr).reshape(1, _LANES)

    # --- per-anchor weights -----------------------------------------------------
    w = (jnp.asarray(weights, jnp.float32).reshape(B, A)
         if weights is not None else jnp.ones((B, A), jnp.float32))

    # --- pad codes, flatten everything lane-dense -------------------------------
    if c_pad != C:
        pad_c = ((0, 0), (0, 0), (0, c_pad - C))
        x3 = jnp.pad(inp, pad_c)
        t3 = jnp.pad(target, pad_c)
    else:
        x3, t3 = inp, target

    n_elems = B * A * c_pad
    rows = -(-n_elems // _LANES)
    tile_rows = min(_MAX_TILE_ROWS, ((rows + 7) // 8) * 8)
    rows_padded = -(-rows // tile_rows) * tile_rows
    n_padded = rows_padded * _LANES
    pad_n = n_padded - n_elems

    x_flat = x3.reshape(-1)
    t_flat = t3.reshape(-1)
    w_flat = jnp.repeat(w.reshape(-1), c_pad)          # lane-dense anchor weights
    if pad_n:
        x_flat = jnp.pad(x_flat, (0, pad_n))
        t_flat = jnp.pad(t_flat, (0, pad_n))
        w_flat = jnp.pad(w_flat, (0, pad_n))

    x2 = x_flat.reshape(rows_padded, _LANES)
    t2 = t_flat.reshape(rows_padded, _LANES)
    w2 = w_flat.reshape(rows_padded, _LANES)

    use_l1 = float(beta) < 1e-5
    kernel = functools.partial(
        _wsl1_kernel,
        beta=float(beta),
        half_over_beta=0.0 if use_l1 else 0.5 / float(beta),
        half_beta=0.0 if use_l1 else 0.5 * float(beta),
        use_l1=use_l1,
    )

    grid = (rows_padded // tile_rows,)
    out2 = pl.pallas_call(
        kernel,
        out_shape=jax.ShapeDtypeStruct((rows_padded, _LANES), out_dtype),
        grid=grid,
        in_specs=[
            pl.BlockSpec((1, _LANES), lambda i: (0, 0)),            # code weights (const)
            pl.BlockSpec((tile_rows, _LANES), lambda i: (i, 0)),    # input
            pl.BlockSpec((tile_rows, _LANES), lambda i: (i, 0)),    # target
            pl.BlockSpec((tile_rows, _LANES), lambda i: (i, 0)),    # anchor weights
        ],
        out_specs=pl.BlockSpec((tile_rows, _LANES), lambda i: (i, 0)),
        compiler_params=pltpu.CompilerParams(
            dimension_semantics=("parallel",)),
    )(cw_row, x2, t2, w2)

    out = out2.reshape(-1)[:n_elems].reshape(B, A, c_pad)
    if c_pad != C:
        out = out[..., :C]
    return out


def _reference(inp, target, code_weights, weights, beta):
    t = jnp.where(jnp.isnan(target), inp, target)
    diff = inp - t
    if code_weights is not None:
        diff = diff * code_weights.reshape(1, 1, -1)
    n = jnp.abs(diff)
    loss = n if beta < 1e-5 else jnp.where(n < beta, 0.5 * n * n / beta, n - 0.5 * beta)
    if weights is not None:
        loss = loss * weights[..., None]
    return loss


if __name__ == "__main__":
    key = jax.random.PRNGKey(0)
    k1, k2, k3 = jax.random.split(key, 3)

    # --- main check: B=2, A=16, C=8 (C divides 128 exactly), smooth-L1 branch ---
    B, A, C = 2, 16, 8
    beta = 1.0 / 9.0

    inp = jax.random.normal(k1, (B, A, C), dtype=jnp.float32)
    target = jax.random.normal(k2, (B, A, C), dtype=jnp.float32)
    target = target.at[0, 0, 0].set(jnp.nan)      # exercise the isnan path
    target = target.at[1, 3, 5].set(jnp.nan)
    weights = jax.random.uniform(k3, (B, A), dtype=jnp.float32)
    code_weights = jnp.linspace(0.5, 1.5, C, dtype=jnp.float32)

    out = weighted_smooth_l1_loss(inp, target, code_weights, weights, beta)
    out = jax.block_until_ready(out)
    ref = _reference(inp, target, code_weights, weights, beta)
    assert out.shape == (B, A, C)
    assert jnp.allclose(out, ref, atol=1e-6, rtol=1e-6), "mismatch vs reference (smooth-L1)"

    # --- secondary check: C=7 (code padding path) + beta<1e-5 (pure L1 branch) ---
    C2 = 7
    inp2 = jax.random.normal(k1, (B, A, C2), dtype=jnp.float32)
    target2 = jax.random.normal(k2, (B, A, C2), dtype=jnp.float32)
    target2 = target2.at[0, 5, 2].set(jnp.nan)
    cw2 = jnp.linspace(1.0, 2.0, C2, dtype=jnp.float32)

    out2 = weighted_smooth_l1_loss(inp2, target2, cw2, weights, beta=0.0)
    out2 = jax.block_until_ready(out2)
    ref2 = _reference(inp2, target2, cw2, weights, beta=0.0)
    assert out2.shape == (B, A, C2)
    assert jnp.allclose(out2, ref2, atol=1e-6, rtol=1e-6), "mismatch vs reference (L1)"

    print("KERNEL_OK")
</pallas_src>

<mosaic_0001>
module attributes {stable_mosaic.version = 11 : i64} {
  func.func @_wsl1_kernel(%arg0: i32, %arg1: memref<1x128xf32, #tpu.memory_space<vmem>>, %arg2: memref<8x128xf32, #tpu.memory_space<vmem>>, %arg3: memref<8x128xf32, #tpu.memory_space<vmem>>, %arg4: memref<8x128xf32, #tpu.memory_space<vmem>>, %arg5: memref<8x128xf32, #tpu.memory_space<vmem>>) attributes {dimension_semantics = [#tpu.dimension_semantics<parallel>], iteration_bounds = array<i64: 1>, scalar_prefetch = 0 : i64, scratch_operands = 0 : i64, tpu.core_type = #tpu.core_type<tc>, window_params = [{pipeline_mode = #tpu.pipeline_mode<synchronous>, transform_indices = @transform_0, window_bounds = array<i64: 1, 128>}, {transform_indices = @transform_1, window_bounds = array<i64: 8, 128>}, {transform_indices = @transform_2, window_bounds = array<i64: 8, 128>}, {transform_indices = @transform_3, window_bounds = array<i64: 8, 128>}, {transform_indices = @transform_4, window_bounds = array<i64: 8, 128>}]} {
    %c0 = arith.constant 0 : index
    %c0_0 = arith.constant 0 : index
    %0 = vector.load %arg2[%c0, %c0_0] : memref<8x128xf32, #tpu.memory_space<vmem>>, vector<8x128xf32>
    %c0_1 = arith.constant 0 : index
    %c0_2 = arith.constant 0 : index
    %1 = vector.load %arg3[%c0_1, %c0_2] : memref<8x128xf32, #tpu.memory_space<vmem>>, vector<8x128xf32>
    %c0_3 = arith.constant 0 : index
    %c0_4 = arith.constant 0 : index
    %2 = vector.load %arg1[%c0_3, %c0_4] : memref<1x128xf32, #tpu.memory_space<vmem>>, vector<1x128xf32>
    %c0_5 = arith.constant 0 : index
    %c0_6 = arith.constant 0 : index
    %3 = vector.load %arg4[%c0_5, %c0_6] : memref<8x128xf32, #tpu.memory_space<vmem>>, vector<8x128xf32>
    %4 = arith.cmpf one, %1, %1 : vector<8x128xf32>
    %5 = arith.select %4, %0, %1 : vector<8x128xi1>, vector<8x128xf32>
    %6 = arith.subf %0, %5 : vector<8x128xf32>
    %7 = vector.broadcast %2 : vector<1x128xf32> to vector<8x128xf32>
    %8 = arith.mulf %6, %7 : vector<8x128xf32>
    %9 = math.absf %8 : vector<8x128xf32>
    %cst = arith.constant 0.111111112 : f32
    %10 = vector.broadcast %cst : f32 to vector<8x128xf32>
    %11 = arith.cmpf olt, %9, %10 : vector<8x128xf32>
    %12 = arith.mulf %9, %9 : vector<8x128xf32>
    %cst_7 = arith.constant 4.500000e+00 : f32
    %13 = vector.broadcast %cst_7 : f32 to vector<8x128xf32>
    %14 = arith.mulf %13, %12 : vector<8x128xf32>
    %cst_8 = arith.constant 0.055555556 : f32
    %15 = vector.broadcast %cst_8 : f32 to vector<8x128xf32>
    %16 = arith.subf %9, %15 : vector<8x128xf32>
    %17 = arith.select %11, %14, %16 : vector<8x128xi1>, vector<8x128xf32>
    %18 = arith.mulf %17, %3 : vector<8x128xf32>
    %c0_9 = arith.constant 0 : index
    %c0_10 = arith.constant 0 : index
    %19 = vector.load %arg5[%c0_9, %c0_10] : memref<8x128xf32, #tpu.memory_space<vmem>>, vector<8x128xf32>
    tpu.vector_store %arg5[%c0_9, %c0_10], %18 {strides = array<i32>} : memref<8x128xf32, #tpu.memory_space<vmem>>, vector<8x128xf32>,
    return
  }
  func.func @transform_0(%arg0: i32) -> (i32, i32) {
    %c0_i32 = arith.constant 0 : i32
    %c0_i32_0 = arith.constant 0 : i32
    %c0_i32_1 = arith.constant 0 : i32
    return %c0_i32, %c0_i32_0 : i32, i32
  }
  func.func @transform_1(%arg0: i32) -> (i32, i32) {
    %c0_i32 = arith.constant 0 : i32
    %c0_i32_0 = arith.constant 0 : i32
    return %arg0, %c0_i32 : i32, i32
  }
  func.func @transform_2(%arg0: i32) -> (i32, i32) {
    %c0_i32 = arith.constant 0 : i32
    %c0_i32_0 = arith.constant 0 : i32
    return %arg0, %c0_i32 : i32, i32
  }
  func.func @transform_3(%arg0: i32) -> (i32, i32) {
    %c0_i32 = arith.constant 0 : i32
    %c0_i32_0 = arith.constant 0 : i32
    return %arg0, %c0_i32 : i32, i32
  }
  func.func @transform_4(%arg0: i32) -> (i32, i32) {
    %c0_i32 = arith.constant 0 : i32
    %c0_i32_0 = arith.constant 0 : i32
    return %arg0, %c0_i32 : i32, i32
  }
}

</mosaic_0001>

<llo_original>
// kernel: tpu_custom_call.1
$region0: #{tpu_custom_call.1}
  #allocation0 [shape = 'u32[]', space=smem, size = 0x4, offset = 0x4, fixed_abs, tag = 'smem constant byte address 0x4 - core index']
  #allocation1 [shape = 'u32[144,128]{1,0:T(1,128)}', space=vmem, size = 0x12000, scoped, tag = 'internal scratch']
  %s0 = inlined_call_operand.hbm [shape: f32[1,128], index: 0, kind: input, shape index: {}]
  %s1 = inlined_call_operand.hbm [shape: f32[8,128], index: 1, kind: input, shape index: {}]
  %s2 = inlined_call_operand.hbm [shape: f32[8,128], index: 2, kind: input, shape index: {}]
  %s3 = inlined_call_operand.vmem [shape: f32[8,128], index: 3, kind: input, shape index: {}]
  %s4 = inlined_call_operand.hbm [shape: f32[8,128], index: 4, kind: output, shape index: {}]
  %s5 = sld [smem:[#allocation0]]
  $region38: #{tpu_custom_call.1} parent=0
    _
  %s7 = ssub.s32 1, %s5
  %s8 = scalar_select 0, %s7, %s5
  $region1: #{tpu_custom_call.1} parent=0
    #allocation2 [shape = 'u8[512]{0}', space=vmem, size = 0x400, scoped, tag = 'input window, operand 0, single buffered']
    #allocation3 [shape = 's32[1]{0}', space=sflag, size = 0x4, scoped, tag = 'scoped memory for tpu_custom_call.1']
    #allocation4 [shape = 's32[1]{0}', space=sflag, size = 0x4, scoped, tag = 'scoped memory for tpu_custom_call.1']
    #allocation5 [shape = 'u8[4096]{0}', space=vmem, size = 0x1000, scoped, tag = 'input window, operand 1, single buffered']
    #allocation6 [shape = 's32[1]{0}', space=sflag, size = 0x4, scoped, tag = 'scoped memory for tpu_custom_call.1']
    #allocation7 [shape = 'u8[4096]{0}', space=vmem, size = 0x1000, scoped, tag = 'input window, operand 2, single buffered']
    #allocation8 [shape = 'u8[4096]{0}', space=vmem, size = 0x1000, scoped, tag = 'output window, operand 0, single buffered']
    %9 = vsyncpa [#allocation3], 0
    %10 = vsyncpa [#allocation6], 0
    %11 = vsyncpa [#allocation4], 0
    // Predicated region
    $region2: #{tpu_custom_call.1} parent=1 // pred_check
      _
    $region3: #{tpu_custom_call.1} parent=1 // pred_check_branch
      %13 = sbr.rel (0) target = $region5
    $region4: #{tpu_custom_call.1} parent=1 // pred_region
      %s15 = ssub.s32 16, 16
      %16 = vsyncadd [#allocation3], %s15
      %s18 = sshll.u32 [#allocation2], 4
      %s19 = int_to_ptr.vmem [resolvable:$true] %s18
      %21 = dma.hbm_to_vmem [thread:$0]  %s0, 16, %s19, [#allocation3]
    $region5: #{tpu_custom_call.1} parent=1 // pred_fallthru
      _
    // Predicated region
    $region6: #{tpu_custom_call.1} parent=1 // pred_check
      _
    $region7: #{tpu_custom_call.1} parent=1 // pred_check_branch
      %23 = sbr.rel (0) target = $region9
    $region8: #{tpu_custom_call.1} parent=1 // pred_region
      %s25 = ssub.s32 128, 128
      %26 = vsyncadd [#allocation6], %s25
      %s28 = sshll.u32 [#allocation5], 4
      %s29 = int_to_ptr.vmem [resolvable:$true] %s28
      %31 = dma.hbm_to_vmem [thread:$0]  %s1, 128, %s29, [#allocation6]
    $region9: #{tpu_custom_call.1} parent=1 // pred_fallthru
      _
    // Predicated region
    $region10: #{tpu_custom_call.1} parent=1 // pred_check
      _
    $region11: #{tpu_custom_call.1} parent=1 // pred_check_branch
      %33 = sbr.rel (0) target = $region13
    $region12: #{tpu_custom_call.1} parent=1 // pred_region
      %s35 = ssub.s32 128, 128
      %36 = vsyncadd [#allocation6], %s35
      %s38 = sshll.u32 [#allocation7], 4
      %s39 = int_to_ptr.vmem [resolvable:$true] %s38
      %41 = dma.hbm_to_vmem [thread:$0]  %s2, 128, %s39, [#allocation6]
    $region13: #{tpu_custom_call.1} parent=1 // pred_fallthru
      _
    // Predicated region
    $region14: #{tpu_custom_call.1} parent=1 // pred_check
      _
    $region15: #{tpu_custom_call.1} parent=1 // pred_check_branch
      %43 = sbr.rel (0) target = $region17
    $region16: #{tpu_custom_call.1} parent=1 // pred_region
      _
    $region17: #{tpu_custom_call.1} parent=1 // pred_fallthru
      _
    // Predicated region
    $region18: #{tpu_custom_call.1} parent=1 // pred_check
      _
    $region19: #{tpu_custom_call.1} parent=1 // pred_check_branch
      %45 = sbr.rel (0) target = $region21
    $region20: #{tpu_custom_call.1} parent=1 // pred_region
      %46 = dma.done [#allocation3], 16
    $region21: #{tpu_custom_call.1} parent=1 // pred_fallthru
      _
    // Predicated region
    $region22: #{tpu_custom_call.1} parent=1 // pred_check
      _
    $region23: #{tpu_custom_call.1} parent=1 // pred_check_branch
      %48 = sbr.rel (0) target = $region25
    $region24: #{tpu_custom_call.1} parent=1 // pred_region
      %49 = dma.done [#allocation6], 128
    $region25: #{tpu_custom_call.1} parent=1 // pred_fallthru
      _
    // Predicated region
    $region26: #{tpu_custom_call.1} parent=1 // pred_check
      _
    $region27: #{tpu_custom_call.1} parent=1 // pred_check_branch
      %51 = sbr.rel (0) target = $region29
    $region28: #{tpu_custom_call.1} parent=1 // pred_region
      %52 = dma.done [#allocation6], 128
    $region29: #{tpu_custom_call.1} parent=1 // pred_fallthru
      _
    %v53 = vld [vmem:[#allocation5] sm:$0xff]
    %v54 = vld [vmem:[#allocation7] sm:$0xff]
    %v55 = vld [vmem:[#allocation2] sm:$0x1]
    %v56 = vld [vmem:[%s3] sm:$0xff]
    %vm57 = vcmp.ne.f32.partialorder %v54, %v54
    %v58 = vsel %vm57, %v53, %v54
    %v59 = vsub.f32 %v53, %v58
    %v61 = vlaneseq
    %v62 = vshrl.u32 %v61, 7
    %v63 = vsub.s32 0, %v62
    %v64 = vrot.slane %v55, %v63
    %v66 = vmul.f32 %v59, %v64
    %v67 = vand.u32 2147483647, %v66
    %vm68 = vcmp.lt.f32.partialorder %v67, 0.11111111
    %v69 = vmul.f32 %v67, %v67
    %v70 = vmul.f32 %v69, 4.5
    %v71 = vsub.f32 %v67, 0.055555556
    %v72 = vsel %vm68, %v70, %v71
    %v73 = vmul.f32 %v72, %v56
    %74 = vst [vmem:[#allocation8] sm:$0xff] %v73
    // Predicated region
    $region30: #{tpu_custom_call.1} parent=1 // pred_check
      _
    $region31: #{tpu_custom_call.1} parent=1 // pred_check_branch
      %76 = sbr.rel (0) target = $region33
    $region32: #{tpu_custom_call.1} parent=1 // pred_region
      %s78 = ssub.s32 128, 128
      %79 = vsyncadd [#allocation4], %s78
      %s81 = sshll.u32 [#allocation8], 4
      %s82 = int_to_ptr.vmem [resolvable:$true] %s81
      %84 = dma.vmem_to_hbm [thread:$0]  %s82, 128, %s4, [#allocation4]
    $region33: #{tpu_custom_call.1} parent=1 // pred_fallthru
      _
    // Predicated region
    $region34: #{tpu_custom_call.1} parent=1 // pred_check
      _
    $region35: #{tpu_custom_call.1} parent=1 // pred_check_branch
      %86 = sbr.rel (0) target = $region37
    $region36: #{tpu_custom_call.1} parent=1 // pred_region
      %87 = dma.done [#allocation4], 128
    $region37: #{tpu_custom_call.1} parent=1 // pred_fallthru
      _
    %88 = vsyncpa [#allocation3], 1
    %89 = vsyncpa [#allocation6], 1
    %90 = vsyncpa [#allocation4], 1

</llo_original>
